<compile_context>
chip_gen: v6e
topology: v6e:2x2x1
jax: 0.10.0
libtpu: 0.0.40
codegen_flags: <defaults>
</compile_context>

<pallas_src>
from functools import partial

import jax
import jax.numpy as jnp
from jax.experimental import pallas as pl
from jax.experimental.pallas import tpu as pltpu


def _round_up(x: int, m: int) -> int:
    return ((x + m - 1) // m) * m


def make_actor_kernel(max_action: float):
    def actor_kernel(s_ref, w1_ref, b1_ref, w2_ref, b2_ref, w3_ref, b3_ref,
                     out_ref):
        # Layer 1: relu(state @ W1 + b1). bf16 operands, f32 accumulation (MXU).
        a = jnp.dot(s_ref[...].astype(w1_ref.dtype), w1_ref[...],
                    preferred_element_type=jnp.float32)
        a = jnp.maximum(a + b1_ref[...], 0.0)
        # Layer 2: relu(a @ W2 + b2).
        a = jnp.dot(a.astype(w2_ref.dtype), w2_ref[...],
                    preferred_element_type=jnp.float32)
        a = jnp.maximum(a + b2_ref[...], 0.0)
        # Fused heads: one lane-dense matmul + tanh covering both discrete and
        # parameter actions (padded columns are zero -> tanh(0) = 0, sliced off
        # outside the kernel). tanh runs on the EUP (free slot vs VALU/MXU).
        h = jnp.dot(a.astype(w3_ref.dtype), w3_ref[...],
                    preferred_element_type=jnp.float32)
        out_ref[...] = (max_action * jnp.tanh(h + b3_ref[...])).astype(out_ref.dtype)

    return actor_kernel


def init_actor_params(key, state_dim, discrete_action_dim, parameter_action_dim,
                      hidden=256):
    """f32 master weights mirroring Actor.__init__ (nn.Linear default init).

    Weights stored transposed vs PyTorch: [in, out]. Biases stored as [1, out].
    """
    ks = jax.random.split(key, 8)

    def linear(kw, kb, fan_in, fan_out):
        bound = 1.0 / jnp.sqrt(fan_in)
        w = jax.random.uniform(kw, (fan_in, fan_out), jnp.float32, -bound, bound)
        b = jax.random.uniform(kb, (1, fan_out), jnp.float32, -bound, bound)
        return w, b

    w1, b1 = linear(ks[0], ks[1], state_dim, hidden)
    w2, b2 = linear(ks[2], ks[3], hidden, hidden)
    w31, b31 = linear(ks[4], ks[5], hidden, discrete_action_dim)
    w32, b32 = linear(ks[6], ks[7], hidden, parameter_action_dim)
    return dict(w1=w1, b1=b1, w2=w2, b2=b2, w31=w31, b31=b31, w32=w32, b32=b32)


def pack_actor_params(params):
    """One-time packing for the kernel.

    * bf16 weights, f32 biases.
    * W1 rows zero-padded so the state feature dim can be lane-padded to 128
      in the wrapper (padded features contribute exactly 0).
    * Heads fused and lane-padded to 128 output columns.
    """
    state_dim = params["w1"].shape[0]
    state_pad = _round_up(state_dim, 128)
    disc_dim = params["w31"].shape[1]
    par_dim = params["w32"].shape[1]
    head_dim = disc_dim + par_dim
    head_pad = _round_up(head_dim, 128)

    w1 = jnp.pad(params["w1"], ((0, state_pad - state_dim), (0, 0)))

    w3 = jnp.concatenate([params["w31"], params["w32"]], axis=1)
    b3 = jnp.concatenate([params["b31"], params["b32"]], axis=1)
    w3 = jnp.pad(w3, ((0, 0), (0, head_pad - head_dim)))
    b3 = jnp.pad(b3, ((0, 0), (0, head_pad - head_dim)))

    packed = dict(
        w1=w1.astype(jnp.bfloat16), b1=params["b1"],
        w2=params["w2"].astype(jnp.bfloat16), b2=params["b2"],
        w3=w3.astype(jnp.bfloat16), b3=b3,
    )
    return packed, disc_dim, par_dim


@partial(jax.jit, static_argnames=("max_action", "disc_dim", "par_dim", "tile_m"))
def actor_forward(state, packed, max_action: float, disc_dim: int, par_dim: int,
                  tile_m: int = 128):
    """state: [B, state_dim] f32. packed: output of pack_actor_params."""
    B, state_dim = state.shape
    state_pad = packed["w1"].shape[0]
    head_pad = packed["w3"].shape[1]

    # Batch tiling: small batches get one tile (padded to a sublane multiple);
    # large batches tile at `tile_m` rows and shard across TCs on v7x.
    if B < tile_m:
        tile_m = _round_up(max(B, 8), 8)
    padded_B = _round_up(B, tile_m)

    # Pad batch to a tile multiple and features to a lane multiple (zeros;
    # padded W1 rows are zero so results are unchanged). Fuses under jit.
    state = jnp.pad(state, ((0, padded_B - B), (0, state_pad - state_dim)))

    grid = (padded_B // tile_m,)

    def resident(a):
        # Constant block index across the batch grid -> weight fetched once,
        # stays VMEM-resident for every batch tile.
        return pl.BlockSpec(a.shape, lambda i: (0,) * a.ndim)

    weights = (packed["w1"], packed["b1"], packed["w2"], packed["b2"],
               packed["w3"], packed["b3"])

    out = pl.pallas_call(
        make_actor_kernel(max_action),
        out_shape=jax.ShapeDtypeStruct((padded_B, head_pad), jnp.float32),
        grid=grid,
        in_specs=[pl.BlockSpec((tile_m, state_pad), lambda i: (i, 0))]
                 + [resident(w) for w in weights],
        out_specs=pl.BlockSpec((tile_m, head_pad), lambda i: (i, 0)),
        compiler_params=pltpu.CompilerParams(
            dimension_semantics=("parallel",)),
    )(state, *weights)

    discrete_action = out[:B, :disc_dim]
    parameter_action = out[:B, disc_dim:disc_dim + par_dim]
    return discrete_action, parameter_action


def actor_forward_ref(state, params, max_action: float):
    """Pure-JAX f32 reference for correctness checking."""
    a = jnp.maximum(state @ params["w1"] + params["b1"], 0.0)
    a = jnp.maximum(a @ params["w2"] + params["b2"], 0.0)
    d = max_action * jnp.tanh(a @ params["w31"] + params["b31"])
    p = max_action * jnp.tanh(a @ params["w32"] + params["b32"])
    return d, p


if __name__ == "__main__":
    key = jax.random.PRNGKey(0)
    k_param, k_state = jax.random.split(key)

    batch = 2
    state_dim = 16
    discrete_action_dim = 4
    parameter_action_dim = 6
    max_action = 1.0

    params = init_actor_params(k_param, state_dim, discrete_action_dim,
                               parameter_action_dim)
    packed, disc_dim, par_dim = pack_actor_params(params)
    state = jax.random.normal(k_state, (batch, state_dim), jnp.float32)

    disc, par = actor_forward(state, packed, max_action, disc_dim, par_dim)
    jax.block_until_ready((disc, par))

    disc_ref, par_ref = actor_forward_ref(state, params, max_action)
    assert disc.shape == (batch, discrete_action_dim)
    assert par.shape == (batch, parameter_action_dim)
    # bf16 weights / bf16 matmul operands with f32 accumulation -> relaxed
    # tolerance vs the pure-f32 reference (tanh outputs are bounded by 1).
    assert jnp.allclose(disc, disc_ref, atol=2e-2, rtol=2e-2)
    assert jnp.allclose(par, par_ref, atol=2e-2, rtol=2e-2)

    print("KERNEL_OK")
</pallas_src>

<mosaic_0001>
module attributes {stable_mosaic.version = 11 : i64} {
  func.func @actor_kernel(%arg0: i32, %arg1: memref<8x128xf32, #tpu.memory_space<vmem>>, %arg2: memref<128x256xbf16, #tpu.memory_space<vmem>>, %arg3: memref<1x256xf32, #tpu.memory_space<vmem>>, %arg4: memref<256x256xbf16, #tpu.memory_space<vmem>>, %arg5: memref<1x256xf32, #tpu.memory_space<vmem>>, %arg6: memref<256x128xbf16, #tpu.memory_space<vmem>>, %arg7: memref<1x128xf32, #tpu.memory_space<vmem>>, %arg8: memref<8x128xf32, #tpu.memory_space<vmem>>) attributes {dimension_semantics = [#tpu.dimension_semantics<parallel>], iteration_bounds = array<i64: 1>, scalar_prefetch = 0 : i64, scratch_operands = 0 : i64, tpu.core_type = #tpu.core_type<tc>, window_params = [{transform_indices = @transform_0, window_bounds = array<i64: 8, 128>}, {pipeline_mode = #tpu.pipeline_mode<synchronous>, transform_indices = @transform_1, window_bounds = array<i64: 128, 256>}, {pipeline_mode = #tpu.pipeline_mode<synchronous>, transform_indices = @transform_2, window_bounds = array<i64: 1, 256>}, {pipeline_mode = #tpu.pipeline_mode<synchronous>, transform_indices = @transform_3, window_bounds = array<i64: 256, 256>}, {pipeline_mode = #tpu.pipeline_mode<synchronous>, transform_indices = @transform_4, window_bounds = array<i64: 1, 256>}, {pipeline_mode = #tpu.pipeline_mode<synchronous>, transform_indices = @transform_5, window_bounds = array<i64: 256, 128>}, {pipeline_mode = #tpu.pipeline_mode<synchronous>, transform_indices = @transform_6, window_bounds = array<i64: 1, 128>}, {transform_indices = @transform_7, window_bounds = array<i64: 8, 128>}]} {
    %c0 = arith.constant 0 : index
    %c0_0 = arith.constant 0 : index
    %0 = vector.load %arg1[%c0, %c0_0] : memref<8x128xf32, #tpu.memory_space<vmem>>, vector<8x128xf32>
    %1 = arith.truncf %0 : vector<8x128xf32> to vector<8x128xbf16>
    %c0_1 = arith.constant 0 : index
    %c0_2 = arith.constant 0 : index
    %2 = vector.load %arg2[%c0_1, %c0_2] : memref<128x256xbf16, #tpu.memory_space<vmem>>, vector<128x256xbf16>
    %cst = arith.constant dense<0.000000e+00> : vector<8x256xf32>
    %3 = tpu.matmul %1, %2, %cst {dimension_numbers = #tpu.dot_dimension_numbers<[1], [0], [0], [1], [0, 0, 1, 1], [], []>} : vector<8x128xbf16>, vector<128x256xbf16>, vector<8x256xf32> -> vector<8x256xf32>
    %c0_3 = arith.constant 0 : index
    %c0_4 = arith.constant 0 : index
    %4 = vector.load %arg3[%c0_3, %c0_4] : memref<1x256xf32, #tpu.memory_space<vmem>>, vector<1x256xf32>
    %5 = vector.broadcast %4 : vector<1x256xf32> to vector<8x256xf32>
    %6 = arith.addf %3, %5 : vector<8x256xf32>
    %cst_5 = arith.constant 0.000000e+00 : f32
    %7 = vector.broadcast %cst_5 : f32 to vector<8x256xf32>
    %8 = arith.maximumf %6, %7 : vector<8x256xf32>
    %9 = arith.truncf %8 : vector<8x256xf32> to vector<8x256xbf16>
    %c0_6 = arith.constant 0 : index
    %c0_7 = arith.constant 0 : index
    %10 = vector.load %arg4[%c0_6, %c0_7] : memref<256x256xbf16, #tpu.memory_space<vmem>>, vector<256x256xbf16>
    %cst_8 = arith.constant dense<0.000000e+00> : vector<8x256xf32>
    %11 = tpu.matmul %9, %10, %cst_8 {dimension_numbers = #tpu.dot_dimension_numbers<[1], [0], [0], [1], [0, 0, 1, 1], [], []>} : vector<8x256xbf16>, vector<256x256xbf16>, vector<8x256xf32> -> vector<8x256xf32>
    %c0_9 = arith.constant 0 : index
    %c0_10 = arith.constant 0 : index
    %12 = vector.load %arg5[%c0_9, %c0_10] : memref<1x256xf32, #tpu.memory_space<vmem>>, vector<1x256xf32>
    %13 = vector.broadcast %12 : vector<1x256xf32> to vector<8x256xf32>
    %14 = arith.addf %11, %13 : vector<8x256xf32>
    %cst_11 = arith.constant 0.000000e+00 : f32
    %15 = vector.broadcast %cst_11 : f32 to vector<8x256xf32>
    %16 = arith.maximumf %14, %15 : vector<8x256xf32>
    %17 = arith.truncf %16 : vector<8x256xf32> to vector<8x256xbf16>
    %c0_12 = arith.constant 0 : index
    %c0_13 = arith.constant 0 : index
    %18 = vector.load %arg6[%c0_12, %c0_13] : memref<256x128xbf16, #tpu.memory_space<vmem>>, vector<256x128xbf16>
    %cst_14 = arith.constant dense<0.000000e+00> : vector<8x128xf32>
    %19 = tpu.matmul %17, %18, %cst_14 {dimension_numbers = #tpu.dot_dimension_numbers<[1], [0], [0], [1], [0, 0, 1, 1], [], []>} : vector<8x256xbf16>, vector<256x128xbf16>, vector<8x128xf32> -> vector<8x128xf32>
    %c0_15 = arith.constant 0 : index
    %c0_16 = arith.constant 0 : index
    %20 = vector.load %arg7[%c0_15, %c0_16] : memref<1x128xf32, #tpu.memory_space<vmem>>, vector<1x128xf32>
    %21 = vector.broadcast %20 : vector<1x128xf32> to vector<8x128xf32>
    %22 = arith.addf %19, %21 : vector<8x128xf32>
    %23 = math.tanh %22 : vector<8x128xf32>
    %cst_17 = arith.constant 1.000000e+00 : f32
    %24 = vector.broadcast %cst_17 : f32 to vector<8x128xf32>
    %25 = arith.mulf %24, %23 : vector<8x128xf32>
    %c0_18 = arith.constant 0 : index
    %c0_19 = arith.constant 0 : index
    %26 = vector.load %arg8[%c0_18, %c0_19] : memref<8x128xf32, #tpu.memory_space<vmem>>, vector<8x128xf32>
    tpu.vector_store %arg8[%c0_18, %c0_19], %25 {strides = array<i32>} : memref<8x128xf32, #tpu.memory_space<vmem>>, vector<8x128xf32>,
    return
  }
  func.func @transform_0(%arg0: i32) -> (i32, i32) {
    %c0_i32 = arith.constant 0 : i32
    %c0_i32_0 = arith.constant 0 : i32
    return %arg0, %c0_i32 : i32, i32
  }
  func.func @transform_1(%arg0: i32) -> (i32, i32) {
    %c0_i32 = arith.constant 0 : i32
    %c0_i32_0 = arith.constant 0 : i32
    %c0_i32_1 = arith.constant 0 : i32
    return %c0_i32, %c0_i32_0 : i32, i32
  }
  func.func @transform_2(%arg0: i32) -> (i32, i32) {
    %c0_i32 = arith.constant 0 : i32
    %c0_i32_0 = arith.constant 0 : i32
    %c0_i32_1 = arith.constant 0 : i32
    return %c0_i32, %c0_i32_0 : i32, i32
  }
  func.func @transform_3(%arg0: i32) -> (i32, i32) {
    %c0_i32 = arith.constant 0 : i32
    %c0_i32_0 = arith.constant 0 : i32
    %c0_i32_1 = arith.constant 0 : i32
    return %c0_i32, %c0_i32_0 : i32, i32
  }
  func.func @transform_4(%arg0: i32) -> (i32, i32) {
    %c0_i32 = arith.constant 0 : i32
    %c0_i32_0 = arith.constant 0 : i32
    %c0_i32_1 = arith.constant 0 : i32
    return %c0_i32, %c0_i32_0 : i32, i32
  }
  func.func @transform_5(%arg0: i32) -> (i32, i32) {
    %c0_i32 = arith.constant 0 : i32
    %c0_i32_0 = arith.constant 0 : i32
    %c0_i32_1 = arith.constant 0 : i32
    return %c0_i32, %c0_i32_0 : i32, i32
  }
  func.func @transform_6(%arg0: i32) -> (i32, i32) {
    %c0_i32 = arith.constant 0 : i32
    %c0_i32_0 = arith.constant 0 : i32
    %c0_i32_1 = arith.constant 0 : i32
    return %c0_i32, %c0_i32_0 : i32, i32
  }
  func.func @transform_7(%arg0: i32) -> (i32, i32) {
    %c0_i32 = arith.constant 0 : i32
    %c0_i32_0 = arith.constant 0 : i32
    return %arg0, %c0_i32 : i32, i32
  }
}

</mosaic_0001>

<llo_original>
// kernel: actor_forward.1
$region0: #{actor_forward.1}
  #allocation0 [shape = 'u32[]', space=smem, size = 0x4, offset = 0x4, fixed_abs, tag = 'smem constant byte address 0x4 - core index']
  #allocation1 [shape = 'u32[144,128]{1,0:T(1,128)}', space=vmem, size = 0x12000, scoped, tag = 'internal scratch']
  %s0 = inlined_call_operand.vmem [shape: f32[8,128], index: 0, kind: input, shape index: {}]
  %s1 = inlined_call_operand.hbm [shape: bf16[128,256], index: 1, kind: input, shape index: {}]
  %s2 = inlined_call_operand.vmem [shape: f32[1,256], index: 2, kind: input, shape index: {}]
  %s3 = inlined_call_operand.hbm [shape: bf16[256,256], index: 3, kind: input, shape index: {}]
  %s4 = inlined_call_operand.vmem [shape: f32[1,256], index: 4, kind: input, shape index: {}]
  %s5 = inlined_call_operand.hbm [shape: bf16[256,128], index: 5, kind: input, shape index: {}]
  %s6 = inlined_call_operand.vmem [shape: f32[1,128], index: 6, kind: input, shape index: {}]
  %s7 = inlined_call_operand.vmem [shape: f32[8,128], index: 7, kind: output, shape index: {}]
  %s8 = sld [smem:[#allocation0]]
  $region50: #{actor_forward.1} parent=0
    _
  %s10 = ssub.s32 1, %s8
  %s11 = scalar_select 0, %s10, %s8
  $region1: #{actor_forward.1} parent=0
    #allocation2 [shape = 'u8[65536]{0}', space=vmem, size = 0x10000, scoped, tag = 'input window, operand 1, single buffered']
    #allocation3 [shape = 's32[1]{0}', space=sflag, size = 0x4, scoped, tag = 'scoped memory for actor_forward.1']
    #allocation4 [shape = 'u8[131072]{0}', space=vmem, size = 0x20000, scoped, tag = 'input window, operand 3, single buffered']
    #allocation5 [shape = 's32[1]{0}', space=sflag, size = 0x4, scoped, tag = 'scoped memory for actor_forward.1']
    #allocation6 [shape = 'u8[65536]{0}', space=vmem, size = 0x10000, scoped, tag = 'input window, operand 5, single buffered']
    %12 = vsyncpa [#allocation3], 0
    %13 = vsyncpa [#allocation5], 0
    // Predicated region
    $region2: #{actor_forward.1} parent=1 // pred_check
      _
    $region3: #{actor_forward.1} parent=1 // pred_check_branch
      %15 = sbr.rel (0) target = $region5
    $region4: #{actor_forward.1} parent=1 // pred_region
      _
    $region5: #{actor_forward.1} parent=1 // pred_fallthru
      _
    // Predicated region
    $region6: #{actor_forward.1} parent=1 // pred_check
      _
    $region7: #{actor_forward.1} parent=1 // pred_check_branch
      %17 = sbr.rel (0) target = $region9
    $region8: #{actor_forward.1} parent=1 // pred_region
      %s19 = ssub.s32 2048, 2048
      %20 = vsyncadd [#allocation3], %s19
      %s21 = sshll.u32 [#allocation2], 4
      %s22 = int_to_ptr.vmem [resolvable:$true] %s21
      %27 = dma.hbm_to_vmem [thread:$0]  %s1, 2048, %s22, [#allocation3], 128, 128, 8
    $region9: #{actor_forward.1} parent=1 // pred_fallthru
      _
    // Predicated region
    $region10: #{actor_forward.1} parent=1 // pred_check
      _
    $region11: #{actor_forward.1} parent=1 // pred_check_branch
      %29 = sbr.rel (0) target = $region13
    $region12: #{actor_forward.1} parent=1 // pred_region
      _
    $region13: #{actor_forward.1} parent=1 // pred_fallthru
      _
    // Predicated region
    $region14: #{actor_forward.1} parent=1 // pred_check
      _
    $region15: #{actor_forward.1} parent=1 // pred_check_branch
      %31 = sbr.rel (0) target = $region17
    $region16: #{actor_forward.1} parent=1 // pred_region
      %s33 = ssub.s32 4096, 4096
      %34 = vsyncadd [#allocation5], %s33
      %s35 = sshll.u32 [#allocation4], 4
      %s36 = int_to_ptr.vmem [resolvable:$true] %s35
      %41 = dma.hbm_to_vmem [thread:$0]  %s3, 4096, %s36, [#allocation5], 128, 128, 8
    $region17: #{actor_forward.1} parent=1 // pred_fallthru
      _
    // Predicated region
    $region18: #{actor_forward.1} parent=1 // pred_check
      _
    $region19: #{actor_forward.1} parent=1 // pred_check_branch
      %43 = sbr.rel (0) target = $region21
    $region20: #{actor_forward.1} parent=1 // pred_region
      _
    $region21: #{actor_forward.1} parent=1 // pred_fallthru
      _
    // Predicated region
    $region22: #{actor_forward.1} parent=1 // pred_check
      _
    $region23: #{actor_forward.1} parent=1 // pred_check_branch
      %45 = sbr.rel (0) target = $region25
    $region24: #{actor_forward.1} parent=1 // pred_region
      %s47 = ssub.s32 2048, 2048
      %48 = vsyncadd [#allocation5], %s47
      %s49 = sshll.u32 [#allocation6], 4
      %s50 = int_to_ptr.vmem [resolvable:$true] %s49
      %55 = dma.hbm_to_vmem [thread:$0]  %s5, 2048, %s50, [#allocation5], 64, 64, 4
    $region25: #{actor_forward.1} parent=1 // pred_fallthru
      _
    // Predicated region
    $region26: #{actor_forward.1} parent=1 // pred_check
      _
    $region27: #{actor_forward.1} parent=1 // pred_check_branch
      %57 = sbr.rel (0) target = $region29
    $region28: #{actor_forward.1} parent=1 // pred_region
      _
    $region29: #{actor_forward.1} parent=1 // pred_fallthru
      _
    // Predicated region
    $region30: #{actor_forward.1} parent=1 // pred_check
      _
    $region31: #{actor_forward.1} parent=1 // pred_check_branch
      %59 = sbr.rel (0) target = $region33
    $region32: #{actor_forward.1} parent=1 // pred_region
      %60 = dma.done [#allocation3], 2048
    $region33: #{actor_forward.1} parent=1 // pred_fallthru
      _
    // Predicated region
    $region34: #{actor_forward.1} parent=1 // pred_check
      _
    $region35: #{actor_forward.1} parent=1 // pred_check_branch
      %62 = sbr.rel (0) target = $region37
    $region36: #{actor_forward.1} parent=1 // pred_region
      %63 = dma.done [#allocation5], 4096
    $region37: #{actor_forward.1} parent=1 // pred_fallthru
      _
    // Predicated region
    $region38: #{actor_forward.1} parent=1 // pred_check
      _
    $region39: #{actor_forward.1} parent=1 // pred_check_branch
      %65 = sbr.rel (0) target = $region41
    $region40: #{actor_forward.1} parent=1 // pred_region
      %66 = dma.done [#allocation5], 2048
    $region41: #{actor_forward.1} parent=1 // pred_fallthru
      _
    %v68 = vld [vmem:[%s0] sm:$0xff]
    %v69 = vpack.c.bf16 %v68, %v68
    %v70 = vld [vmem:[#allocation2] sm:$0xff]
    %v71 = vld [vmem:[#allocation2 + $0x8] sm:$0xff]
    %v72 = vld [vmem:[#allocation2 + $0x10] sm:$0xff]
    %v73 = vld [vmem:[#allocation2 + $0x18] sm:$0xff]
    %v74 = vld [vmem:[#allocation2 + $0x20] sm:$0xff]
    %v75 = vld [vmem:[#allocation2 + $0x28] sm:$0xff]
    %v76 = vld [vmem:[#allocation2 + $0x30] sm:$0xff]
    %v77 = vld [vmem:[#allocation2 + $0x38] sm:$0xff]
    %v78 = vld [vmem:[#allocation2 + $0x40] sm:$0xff]
    %v79 = vld [vmem:[#allocation2 + $0x48] sm:$0xff]
    %v80 = vld [vmem:[#allocation2 + $0x50] sm:$0xff]
    %v81 = vld [vmem:[#allocation2 + $0x58] sm:$0xff]
    %v82 = vld [vmem:[#allocation2 + $0x60] sm:$0xff]
    %v83 = vld [vmem:[#allocation2 + $0x68] sm:$0xff]
    %v84 = vld [vmem:[#allocation2 + $0x70] sm:$0xff]
    %v85 = vld [vmem:[#allocation2 + $0x78] sm:$0xff]
    %v86 = vld [vmem:[%s2] sm:$0x3]
    %v88 = vlaneseq
    %v89 = vshrl.u32 %v88, 7
    %v90 = vsub.s32 0, %v89
    %v91 = vrot.slane %v86, %v90
    %v92 = vlaneseq
    %v93 = vshrl.u32 %v92, 7
    %v94 = vsub.s32 1, %v93
    %v95 = vrot.slane %v86, %v94
    %v114 = vunpack.c.l.b16 %v70
    %v115 = vunpack.c.h.b16 %v70
    %v116 = vunpack.c.l.b16 %v71
    %v117 = vunpack.c.h.b16 %v71
    %v118 = vunpack.c.l.b16 %v72
    %v119 = vunpack.c.h.b16 %v72
    %v120 = vunpack.c.l.b16 %v73
    %v121 = vunpack.c.h.b16 %v73
    %v122 = vunpack.c.l.b16 %v74
    %v123 = vunpack.c.h.b16 %v74
    %v124 = vunpack.c.l.b16 %v75
    %v125 = vunpack.c.h.b16 %v75
    %v126 = vunpack.c.l.b16 %v76
    %v127 = vunpack.c.h.b16 %v76
    %v128 = vunpack.c.l.b16 %v77
    %v129 = vunpack.c.h.b16 %v77
    %v130 = vunpack.c.l.b16 %v78
    %v131 = vunpack.c.h.b16 %v78
    %v132 = vunpack.c.l.b16 %v79
    %v133 = vunpack.c.h.b16 %v79
    %v134 = vunpack.c.l.b16 %v80
    %v135 = vunpack.c.h.b16 %v80
    %v136 = vunpack.c.l.b16 %v81
    %v137 = vunpack.c.h.b16 %v81
    %v138 = vunpack.c.l.b16 %v82
    %v139 = vunpack.c.h.b16 %v82
    %v140 = vunpack.c.l.b16 %v83
    %v141 = vunpack.c.h.b16 %v83
    %v142 = vunpack.c.l.b16 %v84
    %v143 = vunpack.c.h.b16 %v84
    %v144 = vunpack.c.l.b16 %v85
    %v145 = vunpack.c.h.b16 %v85
    %v146 = vpack.c.b16 %v116, %v114
    %v147 = vpack.c.b16 %v117, %v115
    %v148 = vpack.c.b16 %v120, %v118
    %v149 = vpack.c.b16 %v121, %v119
    %v150 = vpack.c.b16 %v124, %v122
    %v151 = vpack.c.b16 %v125, %v123
    %v152 = vpack.c.b16 %v128, %v126
    %v153 = vpack.c.b16 %v129, %v127
    %v154 = vpack.c.b16 %v132, %v130
    %v155 = vpack.c.b16 %v133, %v131
    %v156 = vpack.c.b16 %v136, %v134
    %v157 = vpack.c.b16 %v137, %v135
    %v158 = vpack.c.b16 %v140, %v138
    %v159 = vpack.c.b16 %v141, %v139
    %v160 = vpack.c.b16 %v144, %v142
    %v161 = vpack.c.b16 %v145, %v143
    %178 = vmatprep.subr.bf16.mxu0 %v161
    %179 = vmatpush1.bf16.msra.mxu0 %v160
    %180 = vmatprep.subr.bf16.mxu0 %v159
    %181 = vmatpush1.bf16.msra.mxu0 %v158
    %182 = vmatprep.subr.bf16.mxu0 %v157
    %183 = vmatpush1.bf16.msra.mxu0 %v156
    %184 = vmatprep.subr.bf16.mxu0 %v155
    %185 = vmatpush1.bf16.msra.mxu0 %v154
    %186 = vmatprep.subr.bf16.mxu0 %v153
    %187 = vmatpush1.bf16.msra.mxu0 %v152
    %188 = vmatprep.subr.bf16.mxu0 %v151
    %189 = vmatpush1.bf16.msra.mxu0 %v150
    %190 = vmatprep.subr.bf16.mxu0 %v149
    %191 = vmatpush1.bf16.msra.mxu0 %v148
    %192 = vmatprep.subr.bf16.mxu0 %v147
    %193 = vmatpush1.bf16.msra.mxu0 %v146
    %194 = vmatprep.subr.bf16.mxu0 0
    %195 = vmatpush2.bf16.msra.mxu0 0
    %196 = vmatprep.subr.bf16.mxu0 0
    %197 = vmatpush2.bf16.msra.mxu0 0
    %198 = vmatprep.subr.bf16.mxu0 0
    %199 = vmatpush2.bf16.msra.mxu0 0
    %200 = vmatprep.subr.bf16.mxu0 0
    %201 = vmatpush2.bf16.msra.mxu0 0
    %202 = vmatprep.subr.bf16.mxu0 0
    %203 = vmatpush2.bf16.msra.mxu0 0
    %204 = vmatprep.subr.bf16.mxu0 0
    %205 = vmatpush2.bf16.msra.mxu0 0
    %206 = vmatprep.subr.bf16.mxu0 0
    %207 = vmatpush2.bf16.msra.mxu0 0
    %208 = vmatprep.subr.bf16.mxu0 0
    %209 = vmatpush2.bf16.msra.mxu0 0
    %210 = vmatprep.mubr.bf16.mxu0 0
    %211 = vmatmul.mubr.bf16.gmra.mxu0 %v69
    %v212 = vpop.f32.mrf.mxu0
    %v213 = vadd.f32 %v91, %v212
    %v214 = vpop.f32.mrf.mxu0
    %v215 = vadd.f32 %v95, %v214
    %v216 = vpop.f32.mrf.mxu0
    %v217 = vpop.f32.mrf.mxu0
    %218 = vdwg.mxu0
    %v219 = vmax.f32 %v213, 0.0
    %v220 = vmax.f32 %v215, 0.0
    %v221 = vpack.c.bf16 %v219, %v219
    %v222 = vpack.c.bf16 %v220, %v220
    %v223 = vld [vmem:[#allocation4] sm:$0xff]
    %v224 = vld [vmem:[#allocation4 + $0x8] sm:$0xff]
    %v225 = vld [vmem:[#allocation4 + $0x10] sm:$0xff]
    %v226 = vld [vmem:[#allocation4 + $0x18] sm:$0xff]
    %v227 = vld [vmem:[#allocation4 + $0x20] sm:$0xff]
    %v228 = vld [vmem:[#allocation4 + $0x28] sm:$0xff]
    %v229 = vld [vmem:[#allocation4 + $0x30] sm:$0xff]
    %v230 = vld [vmem:[#allocation4 + $0x38] sm:$0xff]
    %v231 = vld [vmem:[#allocation4 + $0x40] sm:$0xff]
    %v232 = vld [vmem:[#allocation4 + $0x48] sm:$0xff]
    %v233 = vld [vmem:[#allocation4 + $0x50] sm:$0xff]
    %v234 = vld [vmem:[#allocation4 + $0x58] sm:$0xff]
    %v235 = vld [vmem:[#allocation4 + $0x60] sm:$0xff]
    %v236 = vld [vmem:[#allocation4 + $0x68] sm:$0xff]
    %v237 = vld [vmem:[#allocation4 + $0x70] sm:$0xff]
    %v238 = vld [vmem:[#allocation4 + $0x78] sm:$0xff]
    %v239 = vld [vmem:[#allocation4 + $0x80] sm:$0xff]
    %v240 = vld [vmem:[#allocation4 + $0x88] sm:$0xff]
    %v241 = vld [vmem:[#allocation4 + $0x90] sm:$0xff]
    %v242 = vld [vmem:[#allocation4 + $0x98] sm:$0xff]
    %v243 = vld [vmem:[#allocation4 + $0xa0] sm:$0xff]
    %v244 = vld [vmem:[#allocation4 + $0xa8] sm:$0xff]
    %v245 = vld [vmem:[#allocation4 + $0xb0] sm:$0xff]
    %v246 = vld [vmem:[#allocation4 + $0xb8] sm:$0xff]
    %v247 = vld [vmem:[#allocation4 + $0xc0] sm:$0xff]
    %v248 = vld [vmem:[#allocation4 + $0xc8] sm:$0xff]
    %v249 = vld [vmem:[#allocation4 + $0xd0] sm:$0xff]
    %v250 = vld [vmem:[#allocation4 + $0xd8] sm:$0xff]
    %v251 = vld [vmem:[#allocation4 + $0xe0] sm:$0xff]
    %v252 = vld [vmem:[#allocation4 + $0xe8] sm:$0xff]
    %v253 = vld [vmem:[#allocation4 + $0xf0] sm:$0xff]
    %v254 = vld [vmem:[#allocation4 + $0xf8] sm:$0xff]
    %v255 = vld [vmem:[%s4] sm:$0x3]
    %v257 = vlaneseq
    %v258 = vshrl.u32 %v257, 7
    %v259 = vsub.s32 0, %v258
    %v260 = vrot.slane %v255, %v259
    %v261 = vlaneseq
    %v262 = vshrl.u32 %v261, 7
    %v263 = vsub.s32 1, %v262
    %v264 = vrot.slane %v255, %v263
    %v299 = vunpack.c.l.b16 %v223
    %v300 = vunpack.c.h.b16 %v223
    %v301 = vunpack.c.l.b16 %v224
    %v302 = vunpack.c.h.b16 %v224
    %v303 = vunpack.c.l.b16 %v225
    %v304 = vunpack.c.h.b16 %v225
    %v305 = vunpack.c.l.b16 %v226
    %v306 = vunpack.c.h.b16 %v226
    %v307 = vunpack.c.l.b16 %v227
    %v308 = vunpack.c.h.b16 %v227
    %v309 = vunpack.c.l.b16 %v228
    %v310 = vunpack.c.h.b16 %v228
    %v311 = vunpack.c.l.b16 %v229
    %v312 = vunpack.c.h.b16 %v229
    %v313 = vunpack.c.l.b16 %v230
    %v314 = vunpack.c.h.b16 %v230
    %v315 = vunpack.c.l.b16 %v231
    %v316 = vunpack.c.h.b16 %v231
    %v317 = vunpack.c.l.b16 %v232
    %v318 = vunpack.c.h.b16 %v232
    %v319 = vunpack.c.l.b16 %v233
    %v320 = vunpack.c.h.b16 %v233
    %v321 = vunpack.c.l.b16 %v234
    %v322 = vunpack.c.h.b16 %v234
    %v323 = vunpack.c.l.b16 %v235
    %v324 = vunpack.c.h.b16 %v235
    %v325 = vunpack.c.l.b16 %v236
    %v326 = vunpack.c.h.b16 %v236
    %v327 = vunpack.c.l.b16 %v237
    %v328 = vunpack.c.h.b16 %v237
    %v329 = vunpack.c.l.b16 %v238
    %v330 = vunpack.c.h.b16 %v238
    %v331 = vunpack.c.l.b16 %v239
    %v332 = vunpack.c.h.b16 %v239
    %v333 = vunpack.c.l.b16 %v240
    %v334 = vunpack.c.h.b16 %v240
    %v335 = vunpack.c.l.b16 %v241
    %v336 = vunpack.c.h.b16 %v241
    %v337 = vunpack.c.l.b16 %v242
    %v338 = vunpack.c.h.b16 %v242
    %v339 = vunpack.c.l.b16 %v243
    %v340 = vunpack.c.h.b16 %v243
    %v341 = vunpack.c.l.b16 %v244
    %v342 = vunpack.c.h.b16 %v244
    %v343 = vunpack.c.l.b16 %v245
    %v344 = vunpack.c.h.b16 %v245
    %v345 = vunpack.c.l.b16 %v246
    %v346 = vunpack.c.h.b16 %v246
    %v347 = vunpack.c.l.b16 %v247
    %v348 = vunpack.c.h.b16 %v247
    %v349 = vunpack.c.l.b16 %v248
    %v350 = vunpack.c.h.b16 %v248
    %v351 = vunpack.c.l.b16 %v249
    %v352 = vunpack.c.h.b16 %v249
    %v353 = vunpack.c.l.b16 %v250
    %v354 = vunpack.c.h.b16 %v250
    %v355 = vunpack.c.l.b16 %v251
    %v356 = vunpack.c.h.b16 %v251
    %v357 = vunpack.c.l.b16 %v252
    %v358 = vunpack.c.h.b16 %v252
    %v359 = vunpack.c.l.b16 %v253
    %v360 = vunpack.c.h.b16 %v253
    %v361 = vunpack.c.l.b16 %v254
    %v362 = vunpack.c.h.b16 %v254
    %v363 = vpack.c.b16 %v301, %v299
    %v364 = vpack.c.b16 %v302, %v300
    %v365 = vpack.c.b16 %v305, %v303
    %v366 = vpack.c.b16 %v306, %v304
    %v367 = vpack.c.b16 %v309, %v307
    %v368 = vpack.c.b16 %v310, %v308
    %v369 = vpack.c.b16 %v313, %v311
    %v370 = vpack.c.b16 %v314, %v312
    %v371 = vpack.c.b16 %v317, %v315
    %v372 = vpack.c.b16 %v318, %v316
    %v373 = vpack.c.b16 %v321, %v319
    %v374 = vpack.c.b16 %v322, %v320
    %v375 = vpack.c.b16 %v325, %v323
    %v376 = vpack.c.b16 %v326, %v324
    %v377 = vpack.c.b16 %v329, %v327
    %v378 = vpack.c.b16 %v330, %v328
    %v379 = vpack.c.b16 %v333, %v331
    %v380 = vpack.c.b16 %v334, %v332
    %v381 = vpack.c.b16 %v337, %v335
    %v382 = vpack.c.b16 %v338, %v336
    %v383 = vpack.c.b16 %v341, %v339
    %v384 = vpack.c.b16 %v342, %v340
    %v385 = vpack.c.b16 %v345, %v343
    %v386 = vpack.c.b16 %v346, %v344
    %v387 = vpack.c.b16 %v349, %v347
    %v388 = vpack.c.b16 %v350, %v348
    %v389 = vpack.c.b16 %v353, %v351
    %v390 = vpack.c.b16 %v354, %v352
    %v391 = vpack.c.b16 %v357, %v355
    %v392 = vpack.c.b16 %v358, %v356
    %v393 = vpack.c.b16 %v361, %v359
    %v394 = vpack.c.b16 %v362, %v360
    %427 = vmatprep.subr.bf16.mxu0 %v378
    %428 = vmatpush1.bf16.msra.mxu0 %v377
    %429 = vmatprep.subr.bf16.mxu0 %v376
    %430 = vmatpush1.bf16.msra.mxu0 %v375
    %431 = vmatprep.subr.bf16.mxu0 %v374
    %432 = vmatpush1.bf16.msra.mxu0 %v373
    %433 = vmatprep.subr.bf16.mxu0 %v372
    %434 = vmatpush1.bf16.msra.mxu0 %v371
    %435 = vmatprep.subr.bf16.mxu0 %v370
    %436 = vmatpush1.bf16.msra.mxu0 %v369
    %437 = vmatprep.subr.bf16.mxu0 %v368
    %438 = vmatpush1.bf16.msra.mxu0 %v367
    %439 = vmatprep.subr.bf16.mxu0 %v366
    %440 = vmatpush1.bf16.msra.mxu0 %v365
    %441 = vmatprep.subr.bf16.mxu0 %v364
    %442 = vmatpush1.bf16.msra.mxu0 %v363
    %443 = vmatprep.subr.bf16.mxu0 %v394
    %444 = vmatpush2.bf16.msra.mxu0 %v393
    %445 = vmatprep.subr.bf16.mxu0 %v392
    %446 = vmatpush2.bf16.msra.mxu0 %v391
    %447 = vmatprep.subr.bf16.mxu0 %v390
    %448 = vmatpush2.bf16.msra.mxu0 %v389
    %449 = vmatprep.subr.bf16.mxu0 %v388
    %450 = vmatpush2.bf16.msra.mxu0 %v387
    %451 = vmatprep.subr.bf16.mxu0 %v386
    %452 = vmatpush2.bf16.msra.mxu0 %v385
    %453 = vmatprep.subr.bf16.mxu0 %v384
    %454 = vmatpush2.bf16.msra.mxu0 %v383
    %455 = vmatprep.subr.bf16.mxu0 %v382
    %456 = vmatpush2.bf16.msra.mxu0 %v381
    %457 = vmatprep.subr.bf16.mxu0 %v380
    %458 = vmatpush2.bf16.msra.mxu0 %v379
    %459 = vmatprep.mubr.bf16.mxu0 %v222
    %460 = vmatmul.mubr.bf16.gmra.mxu0 %v221
    %v461 = vpop.f32.mrf.mxu0
    %v462 = vadd.f32 %v260, %v461
    %v463 = vpop.f32.mrf.mxu0
    %v464 = vadd.f32 %v264, %v463
    %v465 = vpop.f32.mrf.mxu0
    %v466 = vpop.f32.mrf.mxu0
    %467 = vdwg.mxu0
    %v468 = vmax.f32 %v462, 0.0
    %v469 = vmax.f32 %v464, 0.0
    %v470 = vpack.c.bf16 %v468, %v468
    %v471 = vpack.c.bf16 %v469, %v469
    %v472 = vld [vmem:[#allocation6] sm:$0xf]
    %v473 = vld [vmem:[#allocation6 + $0x4] sm:$0xf]
    %v474 = vld [vmem:[#allocation6 + $0x8] sm:$0xf]
    %v475 = vld [vmem:[#allocation6 + $0xc] sm:$0xf]
    %v476 = vld [vmem:[#allocation6 + $0x10] sm:$0xf]
    %v477 = vld [vmem:[#allocation6 + $0x14] sm:$0xf]
    %v478 = vld [vmem:[#allocation6 + $0x18] sm:$0xf]
    %v479 = vld [vmem:[#allocation6 + $0x1c] sm:$0xf]
    %v480 = vld [vmem:[#allocation6 + $0x20] sm:$0xf]
    %v481 = vld [vmem:[#allocation6 + $0x24] sm:$0xf]
    %v482 = vld [vmem:[#allocation6 + $0x28] sm:$0xf]
    %v483 = vld [vmem:[#allocation6 + $0x2c] sm:$0xf]
    %v484 = vld [vmem:[#allocation6 + $0x30] sm:$0xf]
    %v485 = vld [vmem:[#allocation6 + $0x34] sm:$0xf]
    %v486 = vld [vmem:[#allocation6 + $0x38] sm:$0xf]
    %v487 = vld [vmem:[#allocation6 + $0x3c] sm:$0xf]
    %v488 = vld [vmem:[#allocation6 + $0x40] sm:$0xf]
    %v489 = vld [vmem:[#allocation6 + $0x44] sm:$0xf]
    %v490 = vld [vmem:[#allocation6 + $0x48] sm:$0xf]
    %v491 = vld [vmem:[#allocation6 + $0x4c] sm:$0xf]
    %v492 = vld [vmem:[#allocation6 + $0x50] sm:$0xf]
    %v493 = vld [vmem:[#allocation6 + $0x54] sm:$0xf]
    %v494 = vld [vmem:[#allocation6 + $0x58] sm:$0xf]
    %v495 = vld [vmem:[#allocation6 + $0x5c] sm:$0xf]
    %v496 = vld [vmem:[#allocation6 + $0x60] sm:$0xf]
    %v497 = vld [vmem:[#allocation6 + $0x64] sm:$0xf]
    %v498 = vld [vmem:[#allocation6 + $0x68] sm:$0xf]
    %v499 = vld [vmem:[#allocation6 + $0x6c] sm:$0xf]
    %v500 = vld [vmem:[#allocation6 + $0x70] sm:$0xf]
    %v501 = vld [vmem:[#allocation6 + $0x74] sm:$0xf]
    %v502 = vld [vmem:[#allocation6 + $0x78] sm:$0xf]
    %v503 = vld [vmem:[#allocation6 + $0x7c] sm:$0xf]
    %v504 = vld [vmem:[%s6] sm:$0x1]
    %v506 = vlaneseq
    %v507 = vshrl.u32 %v506, 7
    %v508 = vsub.s32 0, %v507
    %v509 = vrot.slane %v504, %v508
    %v543 = vunpack.c.l.b16 %v472
    %v544 = vunpack.c.l.b16 %v473
    %v545 = vunpack.c.l.b16 %v474
    %v546 = vunpack.c.l.b16 %v475
    %v547 = vunpack.c.l.b16 %v476
    %v548 = vunpack.c.l.b16 %v477
    %v549 = vunpack.c.l.b16 %v478
    %v550 = vunpack.c.l.b16 %v479
    %v551 = vunpack.c.l.b16 %v480
    %v552 = vunpack.c.l.b16 %v481
    %v553 = vunpack.c.l.b16 %v482
    %v554 = vunpack.c.l.b16 %v483
    %v555 = vunpack.c.l.b16 %v484
    %v556 = vunpack.c.l.b16 %v485
    %v557 = vunpack.c.l.b16 %v486
    %v558 = vunpack.c.l.b16 %v487
    %v559 = vunpack.c.l.b16 %v488
    %v560 = vunpack.c.l.b16 %v489
    %v561 = vunpack.c.l.b16 %v490
    %v562 = vunpack.c.l.b16 %v491
    %v563 = vunpack.c.l.b16 %v492
    %v564 = vunpack.c.l.b16 %v493
    %v565 = vunpack.c.l.b16 %v494
    %v566 = vunpack.c.l.b16 %v495
    %v567 = vunpack.c.l.b16 %v496
    %v568 = vunpack.c.l.b16 %v497
    %v569 = vunpack.c.l.b16 %v498
    %v570 = vunpack.c.l.b16 %v499
    %v571 = vunpack.c.l.b16 %v500
    %v572 = vunpack.c.l.b16 %v501
    %v573 = vunpack.c.l.b16 %v502
    %v574 = vunpack.c.l.b16 %v503
    %v575 = vpack.c.b16 %v544, %v543
    %v576 = vpack.c.b16 %v546, %v545
    %v577 = vpack.c.b16 %v548, %v547
    %v578 = vpack.c.b16 %v550, %v549
    %v579 = vpack.c.b16 %v552, %v551
    %v580 = vpack.c.b16 %v554, %v553
    %v581 = vpack.c.b16 %v556, %v555
    %v582 = vpack.c.b16 %v558, %v557
    %v583 = vpack.c.b16 %v560, %v559
    %v584 = vpack.c.b16 %v562, %v561
    %v585 = vpack.c.b16 %v564, %v563
    %v586 = vpack.c.b16 %v566, %v565
    %v587 = vpack.c.b16 %v568, %v567
    %v588 = vpack.c.b16 %v570, %v569
    %v589 = vpack.c.b16 %v572, %v571
    %v590 = vpack.c.b16 %v574, %v573
    %607 = vmatprep.subr.bf16.mxu0 0
    %608 = vmatpush1.bf16.msra.mxu0 %v582
    %609 = vmatprep.subr.bf16.mxu0 0
    %610 = vmatpush1.bf16.msra.mxu0 %v581
    %611 = vmatprep.subr.bf16.mxu0 0
    %612 = vmatpush1.bf16.msra.mxu0 %v580
    %613 = vmatprep.subr.bf16.mxu0 0
    %614 = vmatpush1.bf16.msra.mxu0 %v579
    %615 = vmatprep.subr.bf16.mxu0 0
    %616 = vmatpush1.bf16.msra.mxu0 %v578
    %617 = vmatprep.subr.bf16.mxu0 0
    %618 = vmatpush1.bf16.msra.mxu0 %v577
    %619 = vmatprep.subr.bf16.mxu0 0
    %620 = vmatpush1.bf16.msra.mxu0 %v576
    %621 = vmatprep.subr.bf16.mxu0 0
    %622 = vmatpush1.bf16.msra.mxu0 %v575
    %623 = vmatprep.subr.bf16.mxu0 0
    %624 = vmatpush2.bf16.msra.mxu0 %v590
    %625 = vmatprep.subr.bf16.mxu0 0
    %626 = vmatpush2.bf16.msra.mxu0 %v589
    %627 = vmatprep.subr.bf16.mxu0 0
    %628 = vmatpush2.bf16.msra.mxu0 %v588
    %629 = vmatprep.subr.bf16.mxu0 0
    %630 = vmatpush2.bf16.msra.mxu0 %v587
    %631 = vmatprep.subr.bf16.mxu0 0
    %632 = vmatpush2.bf16.msra.mxu0 %v586
    %633 = vmatprep.subr.bf16.mxu0 0
    %634 = vmatpush2.bf16.msra.mxu0 %v585
    %635 = vmatprep.subr.bf16.mxu0 0
    %636 = vmatpush2.bf16.msra.mxu0 %v584
    %637 = vmatprep.subr.bf16.mxu0 0
    %638 = vmatpush2.bf16.msra.mxu0 %v583
    %639 = vmatprep.mubr.bf16.mxu0 %v471
    %640 = vmatmul.mubr.bf16.gmra.mxu0 %v470
    %v641 = vpop.f32.mrf.mxu0
    %v642 = vadd.f32 %v509, %v641
    %v643 = vpop.f32.mrf.mxu0
    %v644 = vpop.f32.mrf.mxu0
    %v645 = vpop.f32.mrf.mxu0
    %646 = vdwg.mxu0
    %v647 = vtanh.pop %v642
    %648 = vst [vmem:[%s7] sm:$0xff] %v647
    // Predicated region
    $region42: #{actor_forward.1} parent=1 // pred_check
      _
    $region43: #{actor_forward.1} parent=1 // pred_check_branch
      %650 = sbr.rel (0) target = $region45
    $region44: #{actor_forward.1} parent=1 // pred_region
      _
    $region45: #{actor_forward.1} parent=1 // pred_fallthru
      _
    // Predicated region
    $region46: #{actor_forward.1} parent=1 // pred_check
      _
    $region47: #{actor_forward.1} parent=1 // pred_check_branch
      %652 = sbr.rel (0) target = $region49
    $region48: #{actor_forward.1} parent=1 // pred_region
      _
    $region49: #{actor_forward.1} parent=1 // pred_fallthru
      _
    %653 = vsyncpa [#allocation3], 1
    %654 = vsyncpa [#allocation5], 1

</llo_original>
